<compile_context>
chip_gen: v7x
topology: tpu7x:2x2x1
jax: 0.10.0
libtpu: 0.0.40
codegen_flags: <defaults>
</compile_context>

<pallas_src>
import jax
import jax.numpy as jnp
from jax.experimental import pallas as pl
from jax.experimental.pallas import tpu as pltpu


def _logreg_kernel(x_ref, theta_ref, o_ref):
    # x_ref: (TN, D) batch tile; theta_ref: (1, D) resident; o_ref: (TN, 1).
    x = x_ref[...]
    th = theta_ref[...]                                    # (1, D) broadcasts over rows
    logits = jnp.sum(x * th, axis=-1, keepdims=True)       # VPU mul + lane reduce, f32 accum
    o_ref[...] = jax.nn.sigmoid(logits).astype(o_ref.dtype)


def _pick_block_rows(n, d):
    """Largest row tile (multiple of 8, <=1024) whose double-buffered x stream
    fits a VMEM budget that is safe on v5e/v6e/v7x."""
    x_stream_budget = 16 * 1024 * 1024            # 2 buffers of a (TN, D) f32 tile
    tn = x_stream_budget // max(2 * d * 4, 1)
    tn_cap = -(-n // 8) * 8                       # no bigger than the (padded) batch
    tn = max(8, min(int(tn), 1024, tn_cap))
    return (tn // 8) * 8


def logistic_regression(x, theta, *, block_rows=None):
    """x: (N, D) float32, theta: (D, 1) float32 -> sigmoid(x @ theta): (N, 1)."""
    N, D = x.shape
    assert theta.shape == (D, 1)
    x = x.astype(jnp.float32)
    theta_row = theta.astype(jnp.float32).reshape(1, D)    # lane-major view of theta

    TN = block_rows if block_rows is not None else _pick_block_rows(N, D)
    # TODO(synk): for D so large that even a TN=8 tile misses the VMEM budget,
    # add a reduction grid axis over D with an f32 accumulator scratch.
    G = pl.cdiv(N, TN)
    n_pad = G * TN
    if n_pad != N:
        x = jnp.pad(x, ((0, n_pad - N), (0, 0)))           # padded rows sliced off below

    out = pl.pallas_call(
        _logreg_kernel,
        out_shape=jax.ShapeDtypeStruct((n_pad, 1), jnp.float32),
        grid_spec=pltpu.PrefetchScalarGridSpec(
            num_scalar_prefetch=0,
            grid=(G,),
            in_specs=[
                pl.BlockSpec((TN, D), lambda i: (i, 0)),   # streamed / double-buffered
                pl.BlockSpec((1, D), lambda i: (0, 0)),    # theta resident across grid
            ],
            out_specs=pl.BlockSpec((TN, 1), lambda i: (i, 0)),
        ),
        compiler_params=pltpu.CompilerParams(
            dimension_semantics=("parallel",),             # independent row tiles (v7x: 2 TCs)
            vmem_limit_bytes=32 * 1024 * 1024,
        ),
    )(x, theta_row)

    return out[:N]


if __name__ == "__main__":
    key = jax.random.PRNGKey(0)
    N, D = 8, 32    # batch=8, num_dimensions=32 (matches the module spec)

    x = jax.random.normal(key, (N, D), dtype=jnp.float32)

    # Parameter exactly as in the module's __init__: zeros of shape (D, 1).
    theta = jnp.zeros((D, 1), dtype=jnp.float32)
    y = jax.block_until_ready(logistic_regression(x, theta))
    assert y.shape == (N, 1)
    assert jnp.allclose(y, jax.nn.sigmoid(x @ theta), atol=1e-6), "mismatch (zero theta)"

    # Non-zero theta so the matvec path is actually exercised.
    theta2 = jax.random.normal(jax.random.PRNGKey(1), (D, 1), dtype=jnp.float32)
    y2 = jax.block_until_ready(logistic_regression(x, theta2))
    assert jnp.allclose(y2, jax.nn.sigmoid(x @ theta2), atol=1e-5), "mismatch (random theta)"

    # Larger, ragged batch to exercise the multi-tile pipeline and the
    # pad-and-slice path for the final partial tile.
    x3 = jax.random.normal(jax.random.PRNGKey(2), (1000, 256), dtype=jnp.float32)
    theta3 = jax.random.normal(jax.random.PRNGKey(3), (256, 1), dtype=jnp.float32) * 0.1
    y3 = jax.block_until_ready(logistic_regression(x3, theta3, block_rows=256))
    assert y3.shape == (1000, 1)
    assert jnp.allclose(y3, jax.nn.sigmoid(x3 @ theta3), atol=1e-5, rtol=1e-5), \
        "mismatch (tiled ragged batch)"

    print("KERNEL_OK")
</pallas_src>

<mosaic_0001>
module attributes {stable_mosaic.version = 11 : i64} {
  func.func @_logreg_kernel(%arg0: i32, %arg1: memref<8x32xf32, #tpu.memory_space<vmem>>, %arg2: memref<1x32xf32, #tpu.memory_space<vmem>>, %arg3: memref<8x1xf32, #tpu.memory_space<vmem>>) attributes {dimension_semantics = [#tpu.dimension_semantics<parallel>], iteration_bounds = array<i64: 1>, scalar_prefetch = 0 : i64, scratch_operands = 0 : i64, tpu.core_type = #tpu.core_type<tc>, window_params = [{transform_indices = @transform_0, window_bounds = array<i64: 8, 32>}, {pipeline_mode = #tpu.pipeline_mode<synchronous>, transform_indices = @transform_1, window_bounds = array<i64: 1, 32>}, {transform_indices = @transform_2, window_bounds = array<i64: 8, 1>}]} {
    %c0 = arith.constant 0 : index
    %c0_0 = arith.constant 0 : index
    %0 = vector.load %arg1[%c0, %c0_0] : memref<8x32xf32, #tpu.memory_space<vmem>>, vector<8x32xf32>
    %c0_1 = arith.constant 0 : index
    %c0_2 = arith.constant 0 : index
    %1 = vector.load %arg2[%c0_1, %c0_2] : memref<1x32xf32, #tpu.memory_space<vmem>>, vector<1x32xf32>
    %2 = vector.broadcast %1 : vector<1x32xf32> to vector<8x32xf32>
    %3 = arith.mulf %0, %2 : vector<8x32xf32>
    %cst = arith.constant dense<0.000000e+00> : vector<8xf32>
    %4 = vector.multi_reduction <add>, %3, %cst [1] : vector<8x32xf32> to vector<8xf32>
    %5 = vector.shape_cast %4 : vector<8xf32> to vector<8x1xf32>
    %6 = arith.negf %5 : vector<8x1xf32>
    %7 = math.exp %6 : vector<8x1xf32>
    %cst_3 = arith.constant 1.000000e+00 : f32
    %8 = vector.broadcast %cst_3 : f32 to vector<8x1xf32>
    %9 = arith.addf %8, %7 : vector<8x1xf32>
    %10 = arith.divf %8, %9 : vector<8x1xf32>
    %c0_4 = arith.constant 0 : index
    %c0_5 = arith.constant 0 : index
    %11 = vector.load %arg3[%c0_4, %c0_5] : memref<8x1xf32, #tpu.memory_space<vmem>>, vector<8x1xf32>
    tpu.vector_store %arg3[%c0_4, %c0_5], %10 {strides = array<i32>} : memref<8x1xf32, #tpu.memory_space<vmem>>, vector<8x1xf32>,
    return
  }
  func.func @transform_0(%arg0: i32) -> (i32, i32) {
    %c0_i32 = arith.constant 0 : i32
    %c0_i32_0 = arith.constant 0 : i32
    return %arg0, %c0_i32 : i32, i32
  }
  func.func @transform_1(%arg0: i32) -> (i32, i32) {
    %c0_i32 = arith.constant 0 : i32
    %c0_i32_0 = arith.constant 0 : i32
    %c0_i32_1 = arith.constant 0 : i32
    return %c0_i32, %c0_i32_0 : i32, i32
  }
  func.func @transform_2(%arg0: i32) -> (i32, i32) {
    %c0_i32 = arith.constant 0 : i32
    %c0_i32_0 = arith.constant 0 : i32
    return %arg0, %c0_i32 : i32, i32
  }
}

</mosaic_0001>

<llo_original>
// kernel: tpu_custom_call.1
$region0: #{tpu_custom_call.1}
  #allocation0 [shape = 'u32[]', space=smem, size = 0x4, offset = 0x4, fixed_abs, tag = 'smem constant byte address 0x4 - core index']
  #allocation1 [shape = 'u32[144,128]{1,0:T(1,128)}', space=vmem, size = 0x12000, scoped, tag = 'internal scratch']
  %s0 = inlined_call_operand.hbm [shape: f32[8,32], index: 0, kind: input, shape index: {}]
  %s1 = inlined_call_operand.vmem [shape: f32[1,32], index: 1, kind: input, shape index: {}]
  %s2 = inlined_call_operand.vmem [shape: f32[8,1], index: 2, kind: output, shape index: {}]
  %s3 = sld [smem:[#allocation0]]
  $region22: #{tpu_custom_call.1} parent=0
    _
  %s5 = ssub.s32 1, %s3
  %s6 = scalar_select 0, %s5, %s3
  $region1: #{tpu_custom_call.1} parent=0
    #allocation2 [shape = 'u8[4096]{0}', space=vmem, size = 0x1000, scoped, tag = 'input window, operand 0, single buffered']
    #allocation3 [shape = 's32[1]{0}', space=sflag, size = 0x4, scoped, tag = 'scoped memory for tpu_custom_call.1']
    %7 = vsyncpa [#allocation3], 0
    // Predicated region
    $region2: #{tpu_custom_call.1} parent=1 // pred_check
      _
    $region3: #{tpu_custom_call.1} parent=1 // pred_check_branch
      %9 = sbr.rel (0) target = $region5
    $region4: #{tpu_custom_call.1} parent=1 // pred_region
      %s11 = ssub.s32 128, 128
      %12 = vsyncadd [#allocation3], %s11
      %s14 = sshll.u32 [#allocation2], 4
      %s15 = int_to_ptr.vmem [resolvable:$true] %s14
      %17 = dma.hbm_to_vmem [thread:$0]  %s0, 128, %s15, [#allocation3]
    $region5: #{tpu_custom_call.1} parent=1 // pred_fallthru
      _
    // Predicated region
    $region6: #{tpu_custom_call.1} parent=1 // pred_check
      _
    $region7: #{tpu_custom_call.1} parent=1 // pred_check_branch
      %19 = sbr.rel (0) target = $region9
    $region8: #{tpu_custom_call.1} parent=1 // pred_region
      _
    $region9: #{tpu_custom_call.1} parent=1 // pred_fallthru
      _
    // Predicated region
    $region10: #{tpu_custom_call.1} parent=1 // pred_check
      _
    $region11: #{tpu_custom_call.1} parent=1 // pred_check_branch
      %21 = sbr.rel (0) target = $region13
    $region12: #{tpu_custom_call.1} parent=1 // pred_region
      %22 = dma.done [#allocation3], 128
    $region13: #{tpu_custom_call.1} parent=1 // pred_fallthru
      _
    %v23 = vld [vmem:[#allocation2] sm:$0xff]
    %v24 = vld [vmem:[%s1] sm:$0x1]
    %v26 = vlaneseq
    %v27 = vshrl.u32 %v26, 7
    %v28 = vsub.s32 0, %v27
    %v29 = vrot.slane %v24, %v28
    %v31 = vmul.f32 %v23, %v29
    %vm32 = vcmask 261120
    %v33 = vsel %vm32, %v31, 0.0
    %34 = vadd.xlane.f32.xlu0 %v33
    %v35 = vpop.xlane.xlu0 %34
    %v36 = vxor.u32 %v35, 2147483648
    %v37 = vmul.f32 %v36, 1.442695
    %v38 = vpow.pop %v37
    %v39 = vadd.f32 %v38, 1.0
    %v40 = vrcp.pop %v39
    %v41 = vmul.f32 1.0, %v40
    %vm42 = vcmask 7168
    %43 = vst.msk [vmem:[%s2] sm:$0xff] %vm42, %v41
    // Predicated region
    $region14: #{tpu_custom_call.1} parent=1 // pred_check
      _
    $region15: #{tpu_custom_call.1} parent=1 // pred_check_branch
      %45 = sbr.rel (0) target = $region17
    $region16: #{tpu_custom_call.1} parent=1 // pred_region
      _
    $region17: #{tpu_custom_call.1} parent=1 // pred_fallthru
      _
    // Predicated region
    $region18: #{tpu_custom_call.1} parent=1 // pred_check
      _
    $region19: #{tpu_custom_call.1} parent=1 // pred_check_branch
      %47 = sbr.rel (0) target = $region21
    $region20: #{tpu_custom_call.1} parent=1 // pred_region
      _
    $region21: #{tpu_custom_call.1} parent=1 // pred_fallthru
      _
    %48 = vsyncpa [#allocation3], 1

</llo_original>
